<compile_context>
chip_gen: v7x
topology: tpu7x:2x2x1
jax: 0.10.0
libtpu: 0.0.40
codegen_flags: <defaults>
</compile_context>

<pallas_src>
import functools

import jax
import jax.numpy as jnp
from jax.experimental import pallas as pl
from jax.experimental.pallas import tpu as pltpu


def _round_up(x, m):
    return (x + m - 1) // m * m


def _basecnn_kernel(tok_ref, table_ref, wdec_ref, bdec_ref, out_ref, *,
                    n_tokens, kernel_size, valid_len):
    # tok_ref  : (TB, Lp)     int32 tokens (batch tile, length padded to x8)
    # table_ref: (V**K, Dp)   bf16 fused window table (conv, linear, biases folded)
    # wdec_ref : (1, Dp)      f32 decoder weight (zero-padded columns)
    # bdec_ref : (1, 1)       f32 decoder bias
    # out_ref  : (1, 1, TB)   lane-dense per-tile output row
    V = n_tokens
    K = kernel_size
    tok = tok_ref[...]
    TB, Lp = tok.shape
    VK = V ** K
    Dp = table_ref.shape[1]

    # --- window id per position (Horner over K shifted token rows).  The
    # shifts wrap around; wrapped positions (l >= valid_len) yield in-range
    # garbage ids that are masked out before the length max. ---
    win = tok
    for t in range(1, K):
        shifted = jnp.concatenate([tok[:, t:], tok[:, :t]], axis=1)
        win = win * V + shifted

    # --- one-hot over V**K window ids (values 0/1 are exact in bf16) ---
    iota = jax.lax.broadcasted_iota(jnp.int32, (TB, Lp, VK), 2)
    oh = (win[:, :, None] == iota).astype(jnp.bfloat16)          # (TB, Lp, VK)

    # --- fused conv + linear (+ both biases) as ONE 2D MXU matmul:
    #     M = TB*Lp, contraction = V**K, N = Dp (lane-dense). ---
    h = jnp.dot(oh.reshape(TB * Lp, VK), table_ref[...],
                preferred_element_type=jnp.float32)               # (TB*Lp, Dp)
    h = jnp.maximum(h, 0.0)

    # TODO(synk): nn.Dropout omitted (eval-mode identity).

    # --- length max-pool over valid conv positions only ---
    h = h.reshape(TB, Lp, Dp)
    pos = jax.lax.broadcasted_iota(jnp.int32, (TB, Lp, 1), 1)
    h = jnp.where(pos < valid_len, h, -jnp.inf)
    m = jnp.max(h, axis=1)                                        # (TB, Dp) f32

    # --- decoder: contract feature dims directly (no explicit transpose),
    #     producing a lane-dense (1, TB) output row. ---
    out = jax.lax.dot_general(wdec_ref[...], m, (((1,), (1,)), ((), ())),
                              preferred_element_type=jnp.float32)  # (1, TB)
    out = out + bdec_ref[...]
    out_ref[...] = out.reshape(1, 1, TB)


def basecnn_forward(tokens, params, *, batch_tile=256):
    """tokens: int (B, L).  Returns float32 (B,)."""
    assert batch_tile % 8 == 0, "batch_tile must be a multiple of 8"
    tokens = tokens.astype(jnp.int32)
    B, L = tokens.shape
    K, V, H = params['w_conv'].shape
    D = params['w_emb'].shape[1]               # 2H
    L_out = L - K + 1
    assert L_out >= 1

    # ---- fold conv taps + conv bias + pool linear + its bias into a single
    #      (V**K, D) window-lookup table (exactly equivalent: everything up
    #      to the relu is linear in the one-hot of the K-token window). ----
    VK = V ** K
    ids = jnp.arange(VK)
    conv_tab = jnp.broadcast_to(params['b_conv'], (VK, H)).astype(jnp.float32)
    for t in range(K):
        digit = (ids // (V ** (K - 1 - t))) % V
        conv_tab = conv_tab + params['w_conv'][t][digit, :]
    table = conv_tab @ params['w_emb'] + params['b_emb']          # (VK, D)

    # ---- zero-pad the feature dim to 128 lanes (padded cols contribute 0) ----
    Dp = _round_up(max(D, 128), 128)
    table = jnp.pad(table, ((0, 0), (0, Dp - D))).astype(jnp.bfloat16)
    w_dec = jnp.pad(params['w_dec'].astype(jnp.float32), ((0, 0), (0, Dp - D)))
    b_dec = params['b_dec'].astype(jnp.float32).reshape(1, 1)

    # ---- pad length to a sublane multiple so in-kernel reshapes are free ----
    Lp = _round_up(L, 8)
    if Lp != L:
        tokens = jnp.pad(tokens, ((0, 0), (0, Lp - L)))

    # ---- batch tiling: big multiple-of-8 tiles, no over-padding of tiny B ----
    TB = min(batch_tile, _round_up(B, 8))
    nb = pl.cdiv(B, TB)
    B_pad = nb * TB
    if B_pad != B:
        tokens = jnp.pad(tokens, ((0, B_pad - B), (0, 0)))  # pad rows sliced off

    kernel = functools.partial(_basecnn_kernel, n_tokens=V, kernel_size=K,
                               valid_len=L_out)
    out = pl.pallas_call(
        kernel,
        out_shape=jax.ShapeDtypeStruct((nb, 1, TB), jnp.float32),
        grid=(nb,),
        in_specs=[
            pl.BlockSpec((TB, Lp), lambda i: (i, 0)),         # token tile
            pl.BlockSpec((VK, Dp), lambda i: (0, 0)),         # fused table: resident
            pl.BlockSpec((1, Dp), lambda i: (0, 0)),          # decoder weight
            pl.BlockSpec((1, 1), lambda i: (0, 0)),           # decoder bias
        ],
        out_specs=pl.BlockSpec((1, 1, TB), lambda i: (i, 0, 0)),
        compiler_params=pltpu.CompilerParams(
            dimension_semantics=("parallel",),                # 2 TCs on v7x
            vmem_limit_bytes=32 * 1024 * 1024),
    )(tokens, table, w_dec, b_dec)
    return out.reshape(B_pad)[:B]  # .squeeze(1)


def init_params(key, *, n_tokens, input_size, kernel_size):
    """Deterministic synthetic parameters matching the module's shapes."""
    H = input_size
    ks = jax.random.split(key, 6)
    # PyTorch Conv1d weight is (H, V, K); store as (K, V, H).
    w_conv_t = 0.1 * jax.random.normal(ks[0], (H, n_tokens, kernel_size), jnp.float32)
    w_conv = jnp.transpose(w_conv_t, (2, 1, 0))                     # (K, V, H)
    b_conv = 0.1 * jax.random.normal(ks[1], (1, H), jnp.float32)
    # LengthMaxPool1D linear: Linear(H -> 2H); PyTorch weight (2H, H) -> store (H, 2H).
    w_emb = 0.1 * jax.random.normal(ks[2], (H, 2 * H), jnp.float32)
    b_emb = 0.1 * jax.random.normal(ks[3], (1, 2 * H), jnp.float32)
    # decoder: Linear(2H -> 1); PyTorch weight layout (1, 2H) kept as-is.
    w_dec = 0.1 * jax.random.normal(ks[4], (1, 2 * H), jnp.float32)
    b_dec = 0.1 * jax.random.normal(ks[5], (1, 1), jnp.float32)
    return dict(w_conv=w_conv, b_conv=b_conv,
                w_emb=w_emb, b_emb=b_emb,
                w_dec=w_dec, b_dec=b_dec)


def _reference(tokens, params):
    """Pure-JAX reference of the same forward pass (high precision, unfused)."""
    hi = jax.lax.Precision.HIGHEST
    K, V, H = params['w_conv'].shape
    L_out = tokens.shape[1] - K + 1
    oh = jax.nn.one_hot(tokens, V, dtype=jnp.float32)
    conv = sum(jnp.einsum('blv,vh->blh', oh[:, t:t + L_out, :],
                          params['w_conv'][t], precision=hi)
               for t in range(K)) + params['b_conv']
    h = jax.nn.relu(jnp.einsum('blh,hd->bld', conv, params['w_emb'],
                               precision=hi) + params['b_emb'])
    m = jnp.max(h, axis=1)
    return (jnp.einsum('bd,od->bo', m, params['w_dec'], precision=hi)
            + params['b_dec'])[:, 0]


if __name__ == "__main__":
    # config: n_tokens=4, kernel_size=3, input_size=32, dropout=0.0,
    #         make_one_hot=True, activation='relu', linear=True
    B, L = 2, 16
    N_TOKENS, KERNEL_SIZE, INPUT_SIZE = 4, 3, 32

    key = jax.random.PRNGKey(0)
    k_tok, k_par = jax.random.split(key)
    tokens = jax.random.randint(k_tok, (B, L), 0, N_TOKENS, dtype=jnp.int32)
    params = init_params(k_par, n_tokens=N_TOKENS,
                         input_size=INPUT_SIZE, kernel_size=KERNEL_SIZE)

    out = basecnn_forward(tokens, params)
    jax.block_until_ready(out)
    assert out.shape == (B,) and out.dtype == jnp.float32

    ref = _reference(tokens, params)
    assert jnp.allclose(out, ref, rtol=2e-2, atol=2e-2), (out, ref)
    print("KERNEL_OK")
</pallas_src>

<mosaic_0001>
module attributes {stable_mosaic.version = 11 : i64} {
  func.func @_basecnn_kernel(%arg0: i32, %arg1: memref<8x16xi32, #tpu.memory_space<vmem>>, %arg2: memref<64x128xbf16, #tpu.memory_space<vmem>>, %arg3: memref<1x128xf32, #tpu.memory_space<vmem>>, %arg4: memref<1x1xf32, #tpu.memory_space<vmem>>, %arg5: memref<1x1x8xf32, #tpu.memory_space<vmem>>) attributes {dimension_semantics = [#tpu.dimension_semantics<parallel>], iteration_bounds = array<i64: 1>, scalar_prefetch = 0 : i64, scratch_operands = 0 : i64, tpu.core_type = #tpu.core_type<tc>, window_params = [{transform_indices = @transform_0, window_bounds = array<i64: 8, 16>}, {pipeline_mode = #tpu.pipeline_mode<synchronous>, transform_indices = @transform_1, window_bounds = array<i64: 64, 128>}, {pipeline_mode = #tpu.pipeline_mode<synchronous>, transform_indices = @transform_2, window_bounds = array<i64: 1, 128>}, {pipeline_mode = #tpu.pipeline_mode<synchronous>, transform_indices = @transform_3, window_bounds = array<i64: 1, 1>}, {transform_indices = @transform_4, window_bounds = array<i64: 1, 1, 8>}]} {
    %c0 = arith.constant 0 : index
    %c0_0 = arith.constant 0 : index
    %0 = vector.load %arg1[%c0, %c0_0] : memref<8x16xi32, #tpu.memory_space<vmem>>, vector<8x16xi32>
    %1 = vector.extract_strided_slice %0 {offsets = [0, 1], sizes = [8, 15], strides = [1, 1]} : vector<8x16xi32> to vector<8x15xi32>
    %2 = vector.extract_strided_slice %0 {offsets = [0, 0], sizes = [8, 1], strides = [1, 1]} : vector<8x16xi32> to vector<8x1xi32>
    %3 = tpu.concatenate %1, %2 in 1 : vector<8x15xi32>, vector<8x1xi32> -> vector<8x16xi32>
    %c4_i32 = arith.constant 4 : i32
    %4 = vector.broadcast %c4_i32 : i32 to vector<8x16xi32>
    %5 = arith.muli %0, %4 : vector<8x16xi32>
    %6 = arith.addi %5, %3 : vector<8x16xi32>
    %7 = vector.extract_strided_slice %0 {offsets = [0, 2], sizes = [8, 14], strides = [1, 1]} : vector<8x16xi32> to vector<8x14xi32>
    %8 = vector.extract_strided_slice %0 {offsets = [0, 0], sizes = [8, 2], strides = [1, 1]} : vector<8x16xi32> to vector<8x2xi32>
    %9 = tpu.concatenate %7, %8 in 1 : vector<8x14xi32>, vector<8x2xi32> -> vector<8x16xi32>
    %c4_i32_1 = arith.constant 4 : i32
    %10 = vector.broadcast %c4_i32_1 : i32 to vector<8x16xi32>
    %11 = arith.muli %6, %10 : vector<8x16xi32>
    %12 = arith.addi %11, %9 : vector<8x16xi32>
    %13 = tpu.iota {dimensions = array<i32: 2>} : vector<8x16x64xi32>
    %14 = vector.shape_cast %12 : vector<8x16xi32> to vector<8x16x1xi32>
    %15 = vector.broadcast %14 : vector<8x16x1xi32> to vector<8x16x64xi32>
    %16 = arith.cmpi eq, %15, %13 : vector<8x16x64xi32>
    %17 = arith.extui %16 : vector<8x16x64xi1> to vector<8x16x64xi32>
    %18 = arith.sitofp %17 : vector<8x16x64xi32> to vector<8x16x64xf32>
    %19 = arith.truncf %18 : vector<8x16x64xf32> to vector<8x16x64xbf16>
    %20 = vector.shape_cast %19 : vector<8x16x64xbf16> to vector<128x64xbf16>
    %c0_2 = arith.constant 0 : index
    %c0_3 = arith.constant 0 : index
    %21 = vector.load %arg2[%c0_2, %c0_3] : memref<64x128xbf16, #tpu.memory_space<vmem>>, vector<64x128xbf16>
    %cst = arith.constant dense<0.000000e+00> : vector<128x128xf32>
    %22 = tpu.matmul %20, %21, %cst {dimension_numbers = #tpu.dot_dimension_numbers<[1], [0], [0], [1], [0, 0, 1, 1], [], []>} : vector<128x64xbf16>, vector<64x128xbf16>, vector<128x128xf32> -> vector<128x128xf32>
    %cst_4 = arith.constant 0.000000e+00 : f32
    %23 = vector.broadcast %cst_4 : f32 to vector<128x128xf32>
    %24 = arith.maximumf %22, %23 : vector<128x128xf32>
    %25 = vector.shape_cast %24 : vector<128x128xf32> to vector<8x16x128xf32>
    %26 = tpu.iota {dimensions = array<i32: 1>} : vector<8x16x1xi32>
    %c14_i32 = arith.constant 14 : i32
    %27 = vector.broadcast %c14_i32 : i32 to vector<8x16x1xi32>
    %28 = arith.cmpi slt, %26, %27 : vector<8x16x1xi32>
    %cst_5 = arith.constant 0xFF800000 : f32
    %29 = vector.shape_cast %28 : vector<8x16x1xi1> to vector<8x16x1xi1>
    %30 = vector.broadcast %29 : vector<8x16x1xi1> to vector<8x16x128xi1>
    %31 = vector.broadcast %cst_5 : f32 to vector<8x16x128xf32>
    %32 = arith.select %30, %25, %31 : vector<8x16x128xi1>, vector<8x16x128xf32>
    %cst_6 = arith.constant dense<0xFF800000> : vector<8x128xf32>
    %33 = vector.multi_reduction <maximumf>, %32, %cst_6 [1] : vector<8x16x128xf32> to vector<8x128xf32>
    %c0_7 = arith.constant 0 : index
    %c0_8 = arith.constant 0 : index
    %34 = vector.load %arg3[%c0_7, %c0_8] : memref<1x128xf32, #tpu.memory_space<vmem>>, vector<1x128xf32>
    %cst_9 = arith.constant dense<0.000000e+00> : vector<1x8xf32>
    %35 = tpu.matmul %34, %33, %cst_9 {dimension_numbers = #tpu.dot_dimension_numbers<[1], [1], [0], [0], [0, 0, 1, 0], [], []>} : vector<1x128xf32>, vector<8x128xf32>, vector<1x8xf32> -> vector<1x8xf32>
    %c0_10 = arith.constant 0 : index
    %c0_11 = arith.constant 0 : index
    %36 = vector.load %arg4[%c0_10, %c0_11] : memref<1x1xf32, #tpu.memory_space<vmem>>, vector<1x1xf32>
    %37 = vector.broadcast %36 : vector<1x1xf32> to vector<1x8xf32>
    %38 = arith.addf %35, %37 : vector<1x8xf32>
    %39 = vector.shape_cast %38 : vector<1x8xf32> to vector<1x1x8xf32>
    %c0_12 = arith.constant 0 : index
    %c0_13 = arith.constant 0 : index
    %c0_14 = arith.constant 0 : index
    %40 = vector.load %arg5[%c0_12, %c0_13, %c0_14] : memref<1x1x8xf32, #tpu.memory_space<vmem>>, vector<1x1x8xf32>
    tpu.vector_store %arg5[%c0_12, %c0_13, %c0_14], %39 {strides = array<i32>} : memref<1x1x8xf32, #tpu.memory_space<vmem>>, vector<1x1x8xf32>,
    return
  }
  func.func @transform_0(%arg0: i32) -> (i32, i32) {
    %c0_i32 = arith.constant 0 : i32
    %c0_i32_0 = arith.constant 0 : i32
    return %arg0, %c0_i32 : i32, i32
  }
  func.func @transform_1(%arg0: i32) -> (i32, i32) {
    %c0_i32 = arith.constant 0 : i32
    %c0_i32_0 = arith.constant 0 : i32
    %c0_i32_1 = arith.constant 0 : i32
    return %c0_i32, %c0_i32_0 : i32, i32
  }
  func.func @transform_2(%arg0: i32) -> (i32, i32) {
    %c0_i32 = arith.constant 0 : i32
    %c0_i32_0 = arith.constant 0 : i32
    %c0_i32_1 = arith.constant 0 : i32
    return %c0_i32, %c0_i32_0 : i32, i32
  }
  func.func @transform_3(%arg0: i32) -> (i32, i32) {
    %c0_i32 = arith.constant 0 : i32
    %c0_i32_0 = arith.constant 0 : i32
    %c0_i32_1 = arith.constant 0 : i32
    return %c0_i32, %c0_i32_0 : i32, i32
  }
  func.func @transform_4(%arg0: i32) -> (i32, i32, i32) {
    %c0_i32 = arith.constant 0 : i32
    %c0_i32_0 = arith.constant 0 : i32
    %c0_i32_1 = arith.constant 0 : i32
    return %arg0, %c0_i32, %c0_i32_0 : i32, i32, i32
  }
}

</mosaic_0001>

<llo_original>
// kernel: tpu_custom_call.1
$region0: #{tpu_custom_call.1}
  #allocation0 [shape = 'u32[]', space=smem, size = 0x4, offset = 0x4, fixed_abs, tag = 'smem constant byte address 0x4 - core index']
  #allocation1 [shape = 'u32[144,128]{1,0:T(1,128)}', space=vmem, size = 0x12000, scoped, tag = 'internal scratch']
  #allocation2 [shape = 'f32[1,1]{1,0:T(1,128)S(1)}', space=vmem, size = 0x200, scoped, tag = 'scoped memory for tpu_custom_call.1']
  %s0 = inlined_call_operand.hbm [shape: s32[8,16], index: 0, kind: input, shape index: {}]
  %s1 = inlined_call_operand.hbm [shape: bf16[64,128], index: 1, kind: input, shape index: {}]
  %s2 = inlined_call_operand.vmem [shape: f32[1,128], index: 2, kind: input, shape index: {}]
  %s3 = inlined_call_operand.<no memory space> [shape: f32[1,1], index: 3, kind: input, shape index: {}]
  %s4 = inlined_call_operand.hbm [shape: f32[1,1,8], index: 4, kind: output, shape index: {}]
  %s5 = sld [smem:[#allocation0]]
  $region34: #{tpu_custom_call.1} parent=0
    _
  %s7 = ssub.s32 1, %s5
  %s8 = scalar_select 0, %s7, %s5
  %v9 = vstv %s3
  %10 = vst [vmem:[#allocation2] sm:$0x1] %v9
  $region1: #{tpu_custom_call.1} parent=0
    #allocation3 [shape = 'u8[4096]{0}', space=vmem, size = 0x1000, scoped, tag = 'input window, operand 0, single buffered']
    #allocation4 [shape = 's32[1]{0}', space=sflag, size = 0x4, scoped, tag = 'scoped memory for tpu_custom_call.1']
    #allocation5 [shape = 's32[1]{0}', space=sflag, size = 0x4, scoped, tag = 'scoped memory for tpu_custom_call.1']
    #allocation6 [shape = 'u8[16384]{0}', space=vmem, size = 0x4000, scoped, tag = 'input window, operand 1, single buffered']
    #allocation7 [shape = 's32[1]{0}', space=sflag, size = 0x4, scoped, tag = 'scoped memory for tpu_custom_call.1']
    #allocation8 [shape = 'u8[512]{0}', space=vmem, size = 0x400, scoped, tag = 'output window, operand 0, single buffered']
    %11 = vsyncpa [#allocation4], 0
    %12 = vsyncpa [#allocation7], 0
    %13 = vsyncpa [#allocation5], 0
    // Predicated region
    $region2: #{tpu_custom_call.1} parent=1 // pred_check
      _
    $region3: #{tpu_custom_call.1} parent=1 // pred_check_branch
      %15 = sbr.rel (0) target = $region5
    $region4: #{tpu_custom_call.1} parent=1 // pred_region
      %s17 = ssub.s32 128, 128
      %18 = vsyncadd [#allocation4], %s17
      %s20 = sshll.u32 [#allocation3], 4
      %s21 = int_to_ptr.vmem [resolvable:$true] %s20
      %23 = dma.hbm_to_vmem [thread:$0]  %s0, 128, %s21, [#allocation4]
    $region5: #{tpu_custom_call.1} parent=1 // pred_fallthru
      _
    // Predicated region
    $region6: #{tpu_custom_call.1} parent=1 // pred_check
      _
    $region7: #{tpu_custom_call.1} parent=1 // pred_check_branch
      %25 = sbr.rel (0) target = $region9
    $region8: #{tpu_custom_call.1} parent=1 // pred_region
      %s27 = ssub.s32 512, 512
      %28 = vsyncadd [#allocation7], %s27
      %s29 = sshll.u32 [#allocation6], 4
      %s30 = int_to_ptr.vmem [resolvable:$true] %s29
      %35 = dma.hbm_to_vmem [thread:$0]  %s1, 512, %s30, [#allocation7], 64, 64, 4
    $region9: #{tpu_custom_call.1} parent=1 // pred_fallthru
      _
    // Predicated region
    $region10: #{tpu_custom_call.1} parent=1 // pred_check
      _
    $region11: #{tpu_custom_call.1} parent=1 // pred_check_branch
      %37 = sbr.rel (0) target = $region13
    $region12: #{tpu_custom_call.1} parent=1 // pred_region
      _
    $region13: #{tpu_custom_call.1} parent=1 // pred_fallthru
      _
    // Predicated region
    $region14: #{tpu_custom_call.1} parent=1 // pred_check
      _
    $region15: #{tpu_custom_call.1} parent=1 // pred_check_branch
      %39 = sbr.rel (0) target = $region17
    $region16: #{tpu_custom_call.1} parent=1 // pred_region
      _
    $region17: #{tpu_custom_call.1} parent=1 // pred_fallthru
      _
    // Predicated region
    $region18: #{tpu_custom_call.1} parent=1 // pred_check
      _
    $region19: #{tpu_custom_call.1} parent=1 // pred_check_branch
      %41 = sbr.rel (0) target = $region21
    $region20: #{tpu_custom_call.1} parent=1 // pred_region
      %42 = dma.done [#allocation4], 128
    $region21: #{tpu_custom_call.1} parent=1 // pred_fallthru
      _
    // Predicated region
    $region22: #{tpu_custom_call.1} parent=1 // pred_check
      _
    $region23: #{tpu_custom_call.1} parent=1 // pred_check_branch
      %44 = sbr.rel (0) target = $region25
    $region24: #{tpu_custom_call.1} parent=1 // pred_region
      %45 = dma.done [#allocation7], 512
    $region25: #{tpu_custom_call.1} parent=1 // pred_fallthru
      _
    %v47 = vld [vmem:[#allocation3] sm:$0xff]
    %48 = vrot.lane.b32.xlu0 %v47, 127
    %v49 = vpop.permute.xlu0 %48
    %50 = vrot.lane.b32.xlu0 %v47, 15
    %v51 = vpop.permute.xlu0 %50
    %vm52 = vcmask 121856
    %v53 = vsel %vm52, %v49, %v51
    %v54 = vmul.u32 %v47, 4
    %v55 = vadd.s32 %v54, %v53
    %56 = vrot.lane.b32.xlu0 %v47, 126
    %v57 = vpop.permute.xlu0 %56
    %58 = vrot.lane.b32.xlu0 %v47, 14
    %v59 = vpop.permute.xlu0 %58
    %vm60 = vcmask 113664
    %v61 = vsel %vm60, %v57, %v59
    %v62 = vmul.u32 %v55, 4
    %v63 = vadd.s32 %v62, %v61
    %v64 = vlaneseq
    %v65 = vand.u32 %v64, 127
    %v66 = vlaneseq
    %v67 = vshrl.u32 %v66, 7
    %v68 = vsub.s32 0, %v67
    %v69 = vrot.slane %v63, %v68
    %71 = vbcast.lane.b32.xlu0 %v69, 256
    %v72 = vpop.permute.xlu0 %71
    %s74 = sor.u32 256, 8
    %75 = vbcast.lane.b32.xlu0 %v69, %s74
    %v76 = vpop.permute.xlu0 %75
    %v77 = vlaneseq
    %v78 = vshrl.u32 %v77, 7
    %v79 = vsub.s32 1, %v78
    %v80 = vrot.slane %v63, %v79
    %82 = vbcast.lane.b32.xlu0 %v80, 256
    %v83 = vpop.permute.xlu0 %82
    %s85 = sor.u32 256, 8
    %86 = vbcast.lane.b32.xlu0 %v80, %s85
    %v87 = vpop.permute.xlu0 %86
    %v88 = vlaneseq
    %v89 = vshrl.u32 %v88, 7
    %v90 = vsub.s32 2, %v89
    %v91 = vrot.slane %v63, %v90
    %93 = vbcast.lane.b32.xlu0 %v91, 256
    %v94 = vpop.permute.xlu0 %93
    %s96 = sor.u32 256, 8
    %97 = vbcast.lane.b32.xlu0 %v91, %s96
    %v98 = vpop.permute.xlu0 %97
    %v99 = vlaneseq
    %v100 = vshrl.u32 %v99, 7
    %v101 = vsub.s32 3, %v100
    %v102 = vrot.slane %v63, %v101
    %104 = vbcast.lane.b32.xlu0 %v102, 256
    %v105 = vpop.permute.xlu0 %104
    %s107 = sor.u32 256, 8
    %108 = vbcast.lane.b32.xlu0 %v102, %s107
    %v109 = vpop.permute.xlu0 %108
    %v110 = vlaneseq
    %v111 = vshrl.u32 %v110, 7
    %v112 = vsub.s32 4, %v111
    %v113 = vrot.slane %v63, %v112
    %115 = vbcast.lane.b32.xlu0 %v113, 256
    %v116 = vpop.permute.xlu0 %115
    %s118 = sor.u32 256, 8
    %119 = vbcast.lane.b32.xlu0 %v113, %s118
    %v120 = vpop.permute.xlu0 %119
    %v121 = vlaneseq
    %v122 = vshrl.u32 %v121, 7
    %v123 = vsub.s32 5, %v122
    %v124 = vrot.slane %v63, %v123
    %126 = vbcast.lane.b32.xlu0 %v124, 256
    %v127 = vpop.permute.xlu0 %126
    %s129 = sor.u32 256, 8
    %130 = vbcast.lane.b32.xlu0 %v124, %s129
    %v131 = vpop.permute.xlu0 %130
    %v132 = vlaneseq
    %v133 = vshrl.u32 %v132, 7
    %v134 = vsub.s32 6, %v133
    %v135 = vrot.slane %v63, %v134
    %137 = vbcast.lane.b32.xlu0 %v135, 256
    %v138 = vpop.permute.xlu0 %137
    %s140 = sor.u32 256, 8
    %141 = vbcast.lane.b32.xlu0 %v135, %s140
    %v142 = vpop.permute.xlu0 %141
    %v143 = vlaneseq
    %v144 = vshrl.u32 %v143, 7
    %v145 = vsub.s32 7, %v144
    %v146 = vrot.slane %v63, %v145
    %148 = vbcast.lane.b32.xlu0 %v146, 256
    %v149 = vpop.permute.xlu0 %148
    %s151 = sor.u32 256, 8
    %152 = vbcast.lane.b32.xlu0 %v146, %s151
    %v153 = vpop.permute.xlu0 %152
    %vm154 = vcmp.eq.s32.totalorder %v72, %v65
    %vm155 = vcmp.eq.s32.totalorder %v76, %v65
    %vm156 = vcmp.eq.s32.totalorder %v83, %v65
    %vm157 = vcmp.eq.s32.totalorder %v87, %v65
    %vm158 = vcmp.eq.s32.totalorder %v94, %v65
    %vm159 = vcmp.eq.s32.totalorder %v98, %v65
    %vm160 = vcmp.eq.s32.totalorder %v105, %v65
    %vm161 = vcmp.eq.s32.totalorder %v109, %v65
    %vm162 = vcmp.eq.s32.totalorder %v116, %v65
    %vm163 = vcmp.eq.s32.totalorder %v120, %v65
    %vm164 = vcmp.eq.s32.totalorder %v127, %v65
    %vm165 = vcmp.eq.s32.totalorder %v131, %v65
    %vm166 = vcmp.eq.s32.totalorder %v138, %v65
    %vm167 = vcmp.eq.s32.totalorder %v142, %v65
    %vm168 = vcmp.eq.s32.totalorder %v149, %v65
    %vm169 = vcmp.eq.s32.totalorder %v153, %v65
    %v170 = vsel %vm154, 1, 0
    %v171 = vsel %vm155, 1, 0
    %v172 = vsel %vm156, 1, 0
    %v173 = vsel %vm157, 1, 0
    %v174 = vsel %vm158, 1, 0
    %v175 = vsel %vm159, 1, 0
    %v176 = vsel %vm160, 1, 0
    %v177 = vsel %vm161, 1, 0
    %v178 = vsel %vm162, 1, 0
    %v179 = vsel %vm163, 1, 0
    %v180 = vsel %vm164, 1, 0
    %v181 = vsel %vm165, 1, 0
    %v182 = vsel %vm166, 1, 0
    %v183 = vsel %vm167, 1, 0
    %v184 = vsel %vm168, 1, 0
    %v185 = vsel %vm169, 1, 0
    %v186 = vcvt.s32.f32 %v170
    %v187 = vcvt.s32.f32 %v171
    %v188 = vcvt.s32.f32 %v172
    %v189 = vcvt.s32.f32 %v173
    %v190 = vcvt.s32.f32 %v174
    %v191 = vcvt.s32.f32 %v175
    %v192 = vcvt.s32.f32 %v176
    %v193 = vcvt.s32.f32 %v177
    %v194 = vcvt.s32.f32 %v178
    %v195 = vcvt.s32.f32 %v179
    %v196 = vcvt.s32.f32 %v180
    %v197 = vcvt.s32.f32 %v181
    %v198 = vcvt.s32.f32 %v182
    %v199 = vcvt.s32.f32 %v183
    %v200 = vcvt.s32.f32 %v184
    %v201 = vcvt.s32.f32 %v185
    %v202 = vpack.c.bf16 %v187, %v186
    %v203 = vpack.c.bf16 %v189, %v188
    %v204 = vpack.c.bf16 %v191, %v190
    %v205 = vpack.c.bf16 %v193, %v192
    %v206 = vpack.c.bf16 %v195, %v194
    %v207 = vpack.c.bf16 %v197, %v196
    %v208 = vpack.c.bf16 %v199, %v198
    %v209 = vpack.c.bf16 %v201, %v200
    %v210 = vld [vmem:[#allocation6] sm:$0xf]
    %v211 = vld [vmem:[#allocation6 + $0x4] sm:$0xf]
    %v212 = vld [vmem:[#allocation6 + $0x8] sm:$0xf]
    %v213 = vld [vmem:[#allocation6 + $0xc] sm:$0xf]
    %v214 = vld [vmem:[#allocation6 + $0x10] sm:$0xf]
    %v215 = vld [vmem:[#allocation6 + $0x14] sm:$0xf]
    %v216 = vld [vmem:[#allocation6 + $0x18] sm:$0xf]
    %v217 = vld [vmem:[#allocation6 + $0x1c] sm:$0xf]
    %v226 = vunpack.c.l.b16 %v210
    %v227 = vunpack.c.l.b16 %v211
    %v228 = vunpack.c.l.b16 %v212
    %v229 = vunpack.c.l.b16 %v213
    %v230 = vunpack.c.l.b16 %v214
    %v231 = vunpack.c.l.b16 %v215
    %v232 = vunpack.c.l.b16 %v216
    %v233 = vunpack.c.l.b16 %v217
    %v234 = vpack.c.b16 %v227, %v226
    %v235 = vpack.c.b16 %v229, %v228
    %v236 = vpack.c.b16 %v231, %v230
    %v237 = vpack.c.b16 %v233, %v232
    %vm242 = vcmask 523264
    %v244 = vsel %vm242, %v202, 0
    %v247 = vsel %vm242, %v203, 0
    %v250 = vsel %vm242, %v204, 0
    %v253 = vsel %vm242, %v205, 0
    %v256 = vsel %vm242, %v206, 0
    %v259 = vsel %vm242, %v207, 0
    %v262 = vsel %vm242, %v208, 0
    %v265 = vsel %vm242, %v209, 0
    %267 = vmatprep.subr.bf16.mxu0 0
    %268 = vmatpush1.bf16.msra.mxu0 %v234
    %269 = vmatprep.subr.bf16.mxu0 0
    %270 = vmatpush1.bf16.msra.mxu0 %v235
    %271 = vmatprep.subr.bf16.mxu0 0
    %272 = vmatpush1.bf16.msra.mxu0 %v236
    %273 = vmatprep.subr.bf16.mxu0 0
    %274 = vmatpush1.bf16.msra.mxu0 %v237
    %275 = vmatprep.subr.bf16.mxu0 0
    %276 = vmatpush1.bf16.msra.mxu0 0
    %277 = vmatprep.subr.bf16.mxu0 0
    %278 = vmatpush1.bf16.msra.mxu0 0
    %279 = vmatprep.subr.bf16.mxu0 0
    %280 = vmatpush1.bf16.msra.mxu0 0
    %281 = vmatprep.subr.bf16.mxu0 0
    %282 = vmatpush1.bf16.msra.mxu0 0
    %283 = vmatprep.subr.bf16.mxu0 0
    %284 = vmatpush1.bf16.msra.mxu0 0
    %285 = vmatprep.subr.bf16.mxu0 0
    %286 = vmatpush1.bf16.msra.mxu0 0
    %287 = vmatprep.subr.bf16.mxu0 0
    %288 = vmatpush1.bf16.msra.mxu0 0
    %289 = vmatprep.subr.bf16.mxu0 0
    %290 = vmatpush1.bf16.msra.mxu0 0
    %291 = vmatprep.subr.bf16.mxu0 0
    %292 = vmatpush1.bf16.msra.mxu0 0
    %293 = vmatprep.subr.bf16.mxu0 0
    %294 = vmatpush1.bf16.msra.mxu0 0
    %295 = vmatprep.subr.bf16.mxu0 0
    %296 = vmatpush1.bf16.msra.mxu0 0
    %297 = vmatprep.subr.bf16.mxu0 0
    %298 = vmatpush1.bf16.msra.mxu0 0
    %299 = vmatprep.mubr.bf16.mxu0 0
    %300 = vmatmul.mubr.bf16.gmra.mrb[0].mxu0 %v244
    %v301 = vpop.f32.mrb[0].mxu0
    %v302 = vadd.f32 0.0, %v301
    %v303 = vpop.f32.mrb[0].mxu0
    %v304 = vpop.f32.mrb[0].mxu0
    %v305 = vadd.f32 0.0, %v304
    %v306 = vpop.f32.mrb[0].mxu0
    %307 = vmatprep.mubr.bf16.mxu0 0
    %308 = vmatmul.mubr.bf16.gmra.mrb[0].mxu0 %v247
    %v309 = vpop.f32.mrb[0].mxu0
    %v310 = vadd.f32 0.0, %v309
    %v311 = vpop.f32.mrb[0].mxu0
    %v312 = vpop.f32.mrb[0].mxu0
    %v313 = vadd.f32 0.0, %v312
    %v314 = vpop.f32.mrb[0].mxu0
    %315 = vmatprep.mubr.bf16.mxu0 0
    %316 = vmatmul.mubr.bf16.gmra.mrb[0].mxu0 %v250
    %v317 = vpop.f32.mrb[0].mxu0
    %v318 = vadd.f32 0.0, %v317
    %v319 = vpop.f32.mrb[0].mxu0
    %v320 = vpop.f32.mrb[0].mxu0
    %v321 = vadd.f32 0.0, %v320
    %v322 = vpop.f32.mrb[0].mxu0
    %323 = vmatprep.mubr.bf16.mxu0 0
    %324 = vmatmul.mubr.bf16.gmra.mrb[0].mxu0 %v253
    %v325 = vpop.f32.mrb[0].mxu0
    %v326 = vadd.f32 0.0, %v325
    %v327 = vpop.f32.mrb[0].mxu0
    %v328 = vpop.f32.mrb[0].mxu0
    %v329 = vadd.f32 0.0, %v328
    %v330 = vpop.f32.mrb[0].mxu0
    %331 = vmatprep.mubr.bf16.mxu0 0
    %332 = vmatmul.mubr.bf16.gmra.mrb[0].mxu0 %v256
    %v333 = vpop.f32.mrb[0].mxu0
    %v334 = vadd.f32 0.0, %v333
    %v335 = vpop.f32.mrb[0].mxu0
    %v336 = vpop.f32.mrb[0].mxu0
    %v337 = vadd.f32 0.0, %v336
    %v338 = vpop.f32.mrb[0].mxu0
    %339 = vmatprep.mubr.bf16.mxu0 0
    %340 = vmatmul.mubr.bf16.gmra.mrb[0].mxu0 %v259
    %v341 = vpop.f32.mrb[0].mxu0
    %v342 = vadd.f32 0.0, %v341
    %v343 = vpop.f32.mrb[0].mxu0
    %v344 = vpop.f32.mrb[0].mxu0
    %v345 = vadd.f32 0.0, %v344
    %v346 = vpop.f32.mrb[0].mxu0
    %347 = vmatprep.mubr.bf16.mxu0 0
    %348 = vmatmul.mubr.bf16.gmra.mrb[0].mxu0 %v262
    %v349 = vpop.f32.mrb[0].mxu0
    %v350 = vadd.f32 0.0, %v349
    %v351 = vpop.f32.mrb[0].mxu0
    %v352 = vpop.f32.mrb[0].mxu0
    %v353 = vadd.f32 0.0, %v352
    %v354 = vpop.f32.mrb[0].mxu0
    %355 = vmatprep.mubr.bf16.mxu0 0
    %356 = vmatmul.mubr.bf16.gmra.mrb[0].mxu0 %v265
    %v357 = vpop.f32.mrb[0].mxu0
    %v358 = vadd.f32 0.0, %v357
    %v359 = vpop.f32.mrb[0].mxu0
    %v360 = vpop.f32.mrb[0].mxu0
    %v361 = vadd.f32 0.0, %v360
    %v362 = vpop.f32.mrb[0].mxu0
    %363 = vdwg.mxu0
    %v364 = vmax.f32 %v302, 0.0
    %v365 = vmax.f32 %v305, 0.0
    %v366 = vmax.f32 %v310, 0.0
    %v367 = vmax.f32 %v313, 0.0
    %v368 = vmax.f32 %v318, 0.0
    %v369 = vmax.f32 %v321, 0.0
    %v370 = vmax.f32 %v326, 0.0
    %v371 = vmax.f32 %v329, 0.0
    %v372 = vmax.f32 %v334, 0.0
    %v373 = vmax.f32 %v337, 0.0
    %v374 = vmax.f32 %v342, 0.0
    %v375 = vmax.f32 %v345, 0.0
    %v376 = vmax.f32 %v350, 0.0
    %v377 = vmax.f32 %v353, 0.0
    %v378 = vmax.f32 %v358, 0.0
    %v379 = vmax.f32 %v361, 0.0
    %v380 = vlaneseq
    %v381 = vshrl.u32 %v380, 7
    %v382 = vadd.s32 %v381, 8
    %vm383 = vcmp.lt.s32.totalorder %v381, 14
    %vm384 = vcmp.lt.s32.totalorder %v382, 14
    %v385 = vsel %vm383, 1, 0
    %v386 = vsel %vm384, 1, 0
    %vm387 = vcmp.eq.s32.totalorder %v385, 1
    %vm388 = vcmp.eq.s32.totalorder %v386, 1
    %v389 = vsel %vm387, %v364, -inf
    %v390 = vsel %vm388, %v365, -inf
    %v391 = vsel %vm387, %v366, -inf
    %v392 = vsel %vm388, %v367, -inf
    %v393 = vsel %vm387, %v368, -inf
    %v394 = vsel %vm388, %v369, -inf
    %v395 = vsel %vm387, %v370, -inf
    %v396 = vsel %vm388, %v371, -inf
    %v397 = vsel %vm387, %v372, -inf
    %v398 = vsel %vm388, %v373, -inf
    %v399 = vsel %vm387, %v374, -inf
    %v400 = vsel %vm388, %v375, -inf
    %v401 = vsel %vm387, %v376, -inf
    %v402 = vsel %vm388, %v377, -inf
    %v403 = vsel %vm387, %v378, -inf
    %v404 = vsel %vm388, %v379, -inf
    %v405 = vmax.f32 %v389, %v390
    %v406 = vrot.slane %v405, 4
    %v407 = vmax.f32 %v405, %v406
    %v408 = vrot.slane %v407, 2
    %v409 = vmax.f32 %v407, %v408
    %v410 = vrot.slane %v409, 1
    %v411 = vmax.f32 %v409, %v410
    %v412 = vmax.f32 %v391, %v392
    %v413 = vrot.slane %v412, 4
    %v414 = vmax.f32 %v412, %v413
    %v415 = vrot.slane %v414, 2
    %v416 = vmax.f32 %v414, %v415
    %v417 = vrot.slane %v416, 1
    %v418 = vmax.f32 %v416, %v417
    %v419 = vmax.f32 %v393, %v394
    %v420 = vrot.slane %v419, 4
    %v421 = vmax.f32 %v419, %v420
    %v422 = vrot.slane %v421, 2
    %v423 = vmax.f32 %v421, %v422
    %v424 = vrot.slane %v423, 1
    %v425 = vmax.f32 %v423, %v424
    %v426 = vmax.f32 %v395, %v396
    %v427 = vrot.slane %v426, 4
    %v428 = vmax.f32 %v426, %v427
    %v429 = vrot.slane %v428, 2
    %v430 = vmax.f32 %v428, %v429
    %v431 = vrot.slane %v430, 1
    %v432 = vmax.f32 %v430, %v431
    %v433 = vmax.f32 %v397, %v398
    %v434 = vrot.slane %v433, 4
    %v435 = vmax.f32 %v433, %v434
    %v436 = vrot.slane %v435, 2
    %v437 = vmax.f32 %v435, %v436
    %v438 = vrot.slane %v437, 1
    %v439 = vmax.f32 %v437, %v438
    %v440 = vmax.f32 %v399, %v400
    %v441 = vrot.slane %v440, 4
    %v442 = vmax.f32 %v440, %v441
    %v443 = vrot.slane %v442, 2
    %v444 = vmax.f32 %v442, %v443
    %v445 = vrot.slane %v444, 1
    %v446 = vmax.f32 %v444, %v445
    %v447 = vmax.f32 %v401, %v402
    %v448 = vrot.slane %v447, 4
    %v449 = vmax.f32 %v447, %v448
    %v450 = vrot.slane %v449, 2
    %v451 = vmax.f32 %v449, %v450
    %v452 = vrot.slane %v451, 1
    %v453 = vmax.f32 %v451, %v452
    %v454 = vmax.f32 %v403, %v404
    %v455 = vrot.slane %v454, 4
    %v456 = vmax.f32 %v454, %v455
    %v457 = vrot.slane %v456, 2
    %v458 = vmax.f32 %v456, %v457
    %v459 = vrot.slane %v458, 1
    %v460 = vmax.f32 %v458, %v459
    %v461 = vld [vmem:[%s2] sm:$0x1]
    %v462 = vld [vmem:[#allocation2] sm:$0x1]
    %464 = vset.pattern.permute.xlu0 0
    %465 = vperm.xlu0 %464, %v462
    %v466 = vpop.permute.xlu0 %465
    %v468 = vlaneseq
    %v469 = vshrl.u32 %v468, 7
    %v470 = vsub.s32 0, %v469
    %v471 = vrot.slane %v466, %v470
    %vm480 = vcmask 1041409
    %v481 = vsel %vm480, %v418, %v411
    %vm482 = vcmask 1042434
    %v483 = vsel %vm482, %v425, %v481
    %vm484 = vcmask 1043459
    %v485 = vsel %vm484, %v432, %v483
    %vm486 = vcmask 1044484
    %v487 = vsel %vm486, %v439, %v485
    %vm488 = vcmask 1045509
    %v489 = vsel %vm488, %v446, %v487
    %vm490 = vcmask 1046534
    %v491 = vsel %vm490, %v453, %v489
    %vm492 = vcmask 1047559
    %v493 = vsel %vm492, %v460, %v491
    %495 = vmatprep.subr.mxu0 0.0
    %496 = vmatpush1.xpose.msra.mxu0 %v493
    %497 = vmatprep.subr.mxu0 0.0
    %498 = vmatpush1.xpose.msra.mxu0 0.0
    %499 = vmatprep.subr.mxu0 0.0
    %500 = vmatpush1.xpose.msra.mxu0 0.0
    %501 = vmatprep.subr.mxu0 0.0
    %502 = vmatpush1.xpose.msra.mxu0 0.0
    %503 = vmatprep.subr.mxu0 0.0
    %504 = vmatpush1.xpose.msra.mxu0 0.0
    %505 = vmatprep.subr.mxu0 0.0
    %506 = vmatpush1.xpose.msra.mxu0 0.0
    %507 = vmatprep.subr.mxu0 0.0
    %508 = vmatpush1.xpose.msra.mxu0 0.0
    %509 = vmatprep.subr.mxu0 0.0
    %510 = vmatpush1.xpose.msra.mxu0 0.0
    %511 = vmatprep.subr.mxu0 0.0
    %512 = vmatpush1.xpose.msra.mxu0 0.0
    %513 = vmatprep.subr.mxu0 0.0
    %514 = vmatpush1.xpose.msra.mxu0 0.0
    %515 = vmatprep.subr.mxu0 0.0
    %516 = vmatpush1.xpose.msra.mxu0 0.0
    %517 = vmatprep.subr.mxu0 0.0
    %518 = vmatpush1.xpose.msra.mxu0 0.0
    %519 = vmatprep.subr.mxu0 0.0
    %520 = vmatpush1.xpose.msra.mxu0 0.0
    %521 = vmatprep.subr.mxu0 0.0
    %522 = vmatpush1.xpose.msra.mxu0 0.0
    %523 = vmatprep.subr.mxu0 0.0
    %524 = vmatpush1.xpose.msra.mxu0 0.0
    %525 = vmatprep.subr.mxu0 0.0
    %526 = vmatpush1.xpose.msra.mxu0 0.0
    %527 = vmatprep.subr.mxu0 0.0
    %528 = vmatpush1.xpose.msra.mxu0 0.0
    %529 = vmatprep.subr.mxu0 0.0
    %530 = vmatpush1.xpose.msra.mxu0 0.0
    %531 = vmatprep.subr.mxu0 0.0
    %532 = vmatpush1.xpose.msra.mxu0 0.0
    %533 = vmatprep.subr.mxu0 0.0
    %534 = vmatpush1.xpose.msra.mxu0 0.0
    %535 = vmatprep.subr.mxu0 0.0
    %536 = vmatpush1.xpose.msra.mxu0 0.0
    %537 = vmatprep.subr.mxu0 0.0
    %538 = vmatpush1.xpose.msra.mxu0 0.0
    %539 = vmatprep.subr.mxu0 0.0
    %540 = vmatpush1.xpose.msra.mxu0 0.0
    %541 = vmatprep.subr.mxu0 0.0
    %542 = vmatpush1.xpose.msra.mxu0 0.0
    %543 = vmatprep.subr.mxu0 0.0
    %544 = vmatpush1.xpose.msra.mxu0 0.0
    %545 = vmatprep.subr.mxu0 0.0
    %546 = vmatpush1.xpose.msra.mxu0 0.0
    %547 = vmatprep.subr.mxu0 0.0
    %548 = vmatpush1.xpose.msra.mxu0 0.0
    %549 = vmatprep.subr.mxu0 0.0
    %550 = vmatpush1.xpose.msra.mxu0 0.0
    %551 = vmatprep.subr.mxu0 0.0
    %552 = vmatpush1.xpose.msra.mxu0 0.0
    %553 = vmatprep.subr.mxu0 0.0
    %554 = vmatpush1.xpose.msra.mxu0 0.0
    %555 = vmatprep.subr.mxu0 0.0
    %556 = vmatpush1.xpose.msra.mxu0 0.0
    %557 = vmatprep.subr.mxu0 0.0
    %558 = vmatpush1.xpose.msra.mxu0 0.0
    %559 = vmatprep.mubr.f32.mxu0 0.0
    %560 = vmatmul.mubr.f32.gmra.mrb[0].mxu0 %v461
    %v561 = vpop.f32.mrb[0].mxu0
    %v562 = vadd.f32 %v471, %v561
    %v563 = vpop.f32.mrb[0].mxu0
    %564 = vdwg.mxu0
    %vm565 = vcmask 57344
    %566 = vst.msk [vmem:[#allocation8] sm:$0x1] %vm565, %v562
    // Predicated region
    $region26: #{tpu_custom_call.1} parent=1 // pred_check
      _
    $region27: #{tpu_custom_call.1} parent=1 // pred_check_branch
      %568 = sbr.rel (0) target = $region29
    $region28: #{tpu_custom_call.1} parent=1 // pred_region
      %s570 = ssub.s32 16, 16
      %571 = vsyncadd [#allocation5], %s570
      %s573 = sshll.u32 [#allocation8], 4
      %s574 = int_to_ptr.vmem [resolvable:$true] %s573
      %576 = dma.vmem_to_hbm [thread:$0]  %s574, 16, %s4, [#allocation5]
    $region29: #{tpu_custom_call.1} parent=1 // pred_fallthru
      _
    // Predicated region
    $region30: #{tpu_custom_call.1} parent=1 // pred_check
      _
    $region31: #{tpu_custom_call.1} parent=1 // pred_check_branch
      %578 = sbr.rel (0) target = $region33
    $region32: #{tpu_custom_call.1} parent=1 // pred_region
      %579 = dma.done [#allocation5], 16
    $region33: #{tpu_custom_call.1} parent=1 // pred_fallthru
      _
    %580 = vsyncpa [#allocation4], 1
    %581 = vsyncpa [#allocation7], 1
    %582 = vsyncpa [#allocation5], 1

</llo_original>
